<compile_context>
chip_gen: v6e
topology: v6e:2x2x1
jax: 0.10.0
libtpu: 0.0.40
codegen_flags: <defaults>
</compile_context>

<pallas_src>
import jax
import jax.numpy as jnp
from jax.experimental import pallas as pl
from jax.experimental.pallas import tpu as pltpu


def _round_up(x: int, m: int) -> int:
    return ((x + m - 1) // m) * m


def _softmax_write(logits, o_ref):
    """Masked softmax over the (lane-dense, padded) class axis + store."""
    m = jnp.max(logits, axis=-1, keepdims=True)
    e = jnp.exp(logits - m)                            # EUP
    denom = jnp.sum(e, axis=-1, keepdims=True)         # XLU reduce
    # approx=True -> EUP vrcp (otherwise-idle slot); ~1e-3 rel err, fine for probs.
    o_ref[...] = (e * pl.reciprocal(denom, approx=True)).astype(o_ref.dtype)


def _classifier_eval_kernel(x_ref, w_ref, b_ref, o_ref):
    """Linear -> softmax.  Dropout is identity in eval mode.

    x_ref : VMEM [TB, F]      f32 input tile
    w_ref : VMEM [F, C_pad]   bf16 weight (x @ W layout, class axis padded)
    b_ref : VMEM [1, C_pad]   f32 bias  (padded columns = -1e30 -> softmax mask)
    o_ref : VMEM [TB, C_pad]  f32 output probabilities (padded columns -> 0)
    """
    x_bf = x_ref[...].astype(jnp.bfloat16)              # bf16 MXU operand
    logits = jnp.dot(x_bf, w_ref[...], preferred_element_type=jnp.float32)
    logits = logits + b_ref[...]
    _softmax_write(logits, o_ref)


def _classifier_train_kernel(x_ref, mask_ref, w_ref, b_ref, o_ref):
    """Dropout(mask) -> Linear -> softmax.

    The 1/(1-p) inverted-dropout scale is pre-folded into w_ref on the host,
    so only the binary keep-mask multiply happens here (fused with the matmul).
    mask_ref : VMEM [TB, F] f32 keep mask (0.0 / 1.0), host-generated.
    """
    xd = (x_ref[...] * mask_ref[...]).astype(jnp.bfloat16)
    logits = jnp.dot(xd, w_ref[...], preferred_element_type=jnp.float32)
    logits = logits + b_ref[...]
    _softmax_write(logits, o_ref)


def classifier_forward(x, weight, bias, *, drop_prob=0.0, training=False, seed=0):
    """Classifier forward pass as a single batch-tiled Pallas TPU kernel.

    x      : [B, F]  float32
    weight : [C, F]  float32   (PyTorch nn.Linear layout)
    bias   : [C]     float32
    returns: [B, C]  float32   softmax probabilities
    """
    B, F = x.shape
    C = weight.shape[0]
    assert weight.shape == (C, F)
    assert bias.shape == (C,)

    use_dropout = bool(training) and float(drop_prob) > 0.0

    # ---- host-side layout prep (one-time) --------------------------------
    C_pad = _round_up(max(C, 128), 128)        # lane-dense class axis

    w_t = jnp.zeros((F, C_pad), jnp.float32).at[:, :C].set(
        jnp.transpose(weight).astype(jnp.float32))       # [F, C_pad], x @ W form
    if use_dropout:
        # Fold the inverted-dropout survivor scale into the weight (not into x).
        w_t = w_t * jnp.float32(1.0 / (1.0 - float(drop_prob)))
    w_t = w_t.astype(jnp.bfloat16)                        # bf16 MXU operand

    # Padded bias columns get a huge negative value -> exp underflows to 0.
    b_pad = jnp.full((1, C_pad), -1e30, dtype=jnp.float32).at[0, :C].set(
        bias.astype(jnp.float32))

    mask = None
    if use_dropout:
        keep_prob = 1.0 - float(drop_prob)
        key = jax.random.PRNGKey(int(seed))
        mask = jax.random.bernoulli(key, p=keep_prob, shape=(B, F)).astype(
            jnp.float32)

    # ---- batch tiling ------------------------------------------------------
    # v7x has 2 TensorCores: make sure the "parallel" batch axis has >= 2 tiles
    # when there is enough batch to split; on v5e/v6e the extra grid step is
    # ~0.35 us of overhead, negligible.
    if B >= 16:
        TB = min(512, _round_up(-(-B // 2), 8))
    else:
        TB = _round_up(max(B, 8), 8)

    def _vmem_needed(tb):
        n = 2 * tb * F * 4            # double-buffered x tiles (f32)
        n += 2 * tb * C_pad * 4       # double-buffered out tiles (f32)
        n += 2 * F * C_pad * 2        # weight buffers (bf16)
        n += 2 * C_pad * 4            # bias buffers (f32)
        if use_dropout:
            n += 2 * tb * F * 4       # mask tiles (f32)
        return n

    # Shrink TB instead of relying on a hard cap; 48 MiB stays inside v7x's
    # 64 MiB physical VMEM with headroom, and is fine on v5e/v6e (128 MiB).
    VMEM_CAP = 48 << 20
    while TB > 8 and int(_vmem_needed(TB) * 1.5) > VMEM_CAP:
        TB = max(8, _round_up(TB // 2, 8))
    vmem_limit = int(min(max(_vmem_needed(TB) * 1.5, 16 << 20), VMEM_CAP))

    grid = (pl.cdiv(B, TB),)

    compiler_params = pltpu.CompilerParams(
        dimension_semantics=("parallel",),     # batch tiles are independent
        vmem_limit_bytes=vmem_limit)

    bytes_accessed = (B * F * 4 + F * C_pad * 2 + C_pad * 4 + B * C_pad * 4
                      + (B * F * 4 if use_dropout else 0))
    cost_estimate = pl.CostEstimate(
        flops=2 * B * F * C_pad,
        transcendentals=B * C_pad,
        bytes_accessed=bytes_accessed)

    out_shape = jax.ShapeDtypeStruct((B, C_pad), jnp.float32)

    x_spec = pl.BlockSpec((TB, F), lambda i: (i, 0))
    w_spec = pl.BlockSpec((F, C_pad), lambda i: (0, 0))     # resident weight
    b_spec = pl.BlockSpec((1, C_pad), lambda i: (0, 0))     # resident bias
    o_spec = pl.BlockSpec((TB, C_pad), lambda i: (i, 0))

    if use_dropout:
        grid_spec = pltpu.PrefetchScalarGridSpec(
            num_scalar_prefetch=0, grid=grid,
            in_specs=[x_spec,
                      pl.BlockSpec((TB, F), lambda i: (i, 0)),   # mask
                      w_spec, b_spec],
            out_specs=o_spec)
        out = pl.pallas_call(
            _classifier_train_kernel, out_shape=out_shape, grid_spec=grid_spec,
            compiler_params=compiler_params, cost_estimate=cost_estimate,
        )(x, mask, w_t, b_pad)
    else:
        grid_spec = pltpu.PrefetchScalarGridSpec(
            num_scalar_prefetch=0, grid=grid,
            in_specs=[x_spec, w_spec, b_spec],
            out_specs=o_spec)
        out = pl.pallas_call(
            _classifier_eval_kernel, out_shape=out_shape, grid_spec=grid_spec,
            compiler_params=compiler_params, cost_estimate=cost_estimate,
        )(x, w_t, b_pad)

    return out[:, :C]


if __name__ == "__main__":
    # Synthetic jparams: fcLayers[0]=32 input features, n_class=10,
    # class_dropProb=0.2, class_activation=softmax.
    B, F_IN, N_CLASS = 8, 32, 10
    DROP_P = 0.2
    SEED = 1234

    key = jax.random.PRNGKey(0)
    kx, kw, kb = jax.random.split(key, 3)

    x = jax.random.normal(kx, (B, F_IN), dtype=jnp.float32)
    # Deterministic "init" matching nn.Linear's uniform(-1/sqrt(F), 1/sqrt(F)).
    bound = 1.0 / (F_IN ** 0.5)
    weight = jax.random.uniform(kw, (N_CLASS, F_IN), minval=-bound, maxval=bound,
                                dtype=jnp.float32)
    bias = jax.random.uniform(kb, (N_CLASS,), minval=-bound, maxval=bound,
                              dtype=jnp.float32)

    # ---- eval-mode forward (dropout = identity), the inference path --------
    out_eval = classifier_forward(x, weight, bias, drop_prob=DROP_P,
                                  training=False)
    out_eval = jax.block_until_ready(out_eval)

    ref_eval = jax.nn.softmax(x @ weight.T + bias, axis=-1)
    assert out_eval.shape == (B, N_CLASS)
    # bf16 MXU inputs + approx EUP reciprocal -> slightly loose tolerance.
    assert jnp.allclose(out_eval, ref_eval, atol=1e-2, rtol=1e-2), \
        "eval mismatch vs reference"
    assert jnp.allclose(jnp.sum(out_eval, axis=-1), 1.0, atol=5e-3), \
        "eval softmax rows must sum to 1"

    # ---- train-mode forward (host-generated dropout mask) ------------------
    out_train = classifier_forward(x, weight, bias, drop_prob=DROP_P,
                                   training=True, seed=SEED)
    out_train = jax.block_until_ready(out_train)
    assert out_train.shape == (B, N_CLASS)

    # Reference with the identical mask (same seed / derivation as the wrapper).
    keep = jax.random.bernoulli(jax.random.PRNGKey(SEED), p=1.0 - DROP_P,
                                shape=(B, F_IN)).astype(jnp.float32)
    x_drop = x * keep / (1.0 - DROP_P)
    ref_train = jax.nn.softmax(x_drop @ weight.T + bias, axis=-1)
    assert jnp.allclose(out_train, ref_train, atol=1e-2, rtol=1e-2), \
        "train mismatch vs reference"
    assert jnp.allclose(jnp.sum(out_train, axis=-1), 1.0, atol=5e-3), \
        "train-mode softmax rows must sum to 1"

    print("KERNEL_OK")
</pallas_src>

<mosaic_0001>
module attributes {stable_mosaic.version = 11 : i64} {
  func.func @_classifier_eval_kernel(%arg0: i32, %arg1: memref<8x32xf32, #tpu.memory_space<vmem>>, %arg2: memref<32x128xbf16, #tpu.memory_space<vmem>>, %arg3: memref<1x128xf32, #tpu.memory_space<vmem>>, %arg4: memref<8x128xf32, #tpu.memory_space<vmem>>) attributes {dimension_semantics = [#tpu.dimension_semantics<parallel>], iteration_bounds = array<i64: 1>, scalar_prefetch = 0 : i64, scratch_operands = 0 : i64, tpu.core_type = #tpu.core_type<tc>, window_params = [{transform_indices = @transform_0, window_bounds = array<i64: 8, 32>}, {pipeline_mode = #tpu.pipeline_mode<synchronous>, transform_indices = @transform_1, window_bounds = array<i64: 32, 128>}, {pipeline_mode = #tpu.pipeline_mode<synchronous>, transform_indices = @transform_2, window_bounds = array<i64: 1, 128>}, {transform_indices = @transform_3, window_bounds = array<i64: 8, 128>}]} {
    %c0 = arith.constant 0 : index
    %c0_0 = arith.constant 0 : index
    %0 = vector.load %arg1[%c0, %c0_0] : memref<8x32xf32, #tpu.memory_space<vmem>>, vector<8x32xf32>
    %1 = arith.truncf %0 : vector<8x32xf32> to vector<8x32xbf16>
    %c0_1 = arith.constant 0 : index
    %c0_2 = arith.constant 0 : index
    %2 = vector.load %arg2[%c0_1, %c0_2] : memref<32x128xbf16, #tpu.memory_space<vmem>>, vector<32x128xbf16>
    %cst = arith.constant dense<0.000000e+00> : vector<8x128xf32>
    %3 = tpu.matmul %1, %2, %cst {dimension_numbers = #tpu.dot_dimension_numbers<[1], [0], [0], [1], [0, 0, 1, 1], [], []>} : vector<8x32xbf16>, vector<32x128xbf16>, vector<8x128xf32> -> vector<8x128xf32>
    %c0_3 = arith.constant 0 : index
    %c0_4 = arith.constant 0 : index
    %4 = vector.load %arg3[%c0_3, %c0_4] : memref<1x128xf32, #tpu.memory_space<vmem>>, vector<1x128xf32>
    %5 = vector.broadcast %4 : vector<1x128xf32> to vector<8x128xf32>
    %6 = arith.addf %3, %5 : vector<8x128xf32>
    %cst_5 = arith.constant dense<0xFF800000> : vector<8xf32>
    %7 = vector.multi_reduction <maximumf>, %6, %cst_5 [1] : vector<8x128xf32> to vector<8xf32>
    %8 = vector.shape_cast %7 : vector<8xf32> to vector<8x1xf32>
    %9 = vector.broadcast %8 : vector<8x1xf32> to vector<8x128xf32>
    %10 = arith.subf %6, %9 : vector<8x128xf32>
    %11 = math.exp %10 : vector<8x128xf32>
    %cst_6 = arith.constant dense<0.000000e+00> : vector<8xf32>
    %12 = vector.multi_reduction <add>, %11, %cst_6 [1] : vector<8x128xf32> to vector<8xf32>
    %13 = vector.shape_cast %12 : vector<8xf32> to vector<8x1xf32>
    %14 = tpu.reciprocal %13 {approx = true} : vector<8x1xf32> -> vector<8x1xf32>
    %15 = vector.broadcast %14 : vector<8x1xf32> to vector<8x128xf32>
    %16 = arith.mulf %11, %15 : vector<8x128xf32>
    %c0_7 = arith.constant 0 : index
    %c0_8 = arith.constant 0 : index
    %17 = vector.load %arg4[%c0_7, %c0_8] : memref<8x128xf32, #tpu.memory_space<vmem>>, vector<8x128xf32>
    tpu.vector_store %arg4[%c0_7, %c0_8], %16 {strides = array<i32>} : memref<8x128xf32, #tpu.memory_space<vmem>>, vector<8x128xf32>,
    return
  }
  func.func @transform_0(%arg0: i32) -> (i32, i32) {
    %c0_i32 = arith.constant 0 : i32
    %c0_i32_0 = arith.constant 0 : i32
    return %arg0, %c0_i32 : i32, i32
  }
  func.func @transform_1(%arg0: i32) -> (i32, i32) {
    %c0_i32 = arith.constant 0 : i32
    %c0_i32_0 = arith.constant 0 : i32
    %c0_i32_1 = arith.constant 0 : i32
    return %c0_i32, %c0_i32_0 : i32, i32
  }
  func.func @transform_2(%arg0: i32) -> (i32, i32) {
    %c0_i32 = arith.constant 0 : i32
    %c0_i32_0 = arith.constant 0 : i32
    %c0_i32_1 = arith.constant 0 : i32
    return %c0_i32, %c0_i32_0 : i32, i32
  }
  func.func @transform_3(%arg0: i32) -> (i32, i32) {
    %c0_i32 = arith.constant 0 : i32
    %c0_i32_0 = arith.constant 0 : i32
    return %arg0, %c0_i32 : i32, i32
  }
}

</mosaic_0001>

<llo_original>
// kernel: tpu_custom_call.1
$region0: #{tpu_custom_call.1}
  #allocation0 [shape = 'u32[]', space=smem, size = 0x4, offset = 0x4, fixed_abs, tag = 'smem constant byte address 0x4 - core index']
  #allocation1 [shape = 'u32[144,128]{1,0:T(1,128)}', space=vmem, size = 0x12000, scoped, tag = 'internal scratch']
  %s0 = inlined_call_operand.hbm [shape: f32[8,32], index: 0, kind: input, shape index: {}]
  %s1 = inlined_call_operand.hbm [shape: bf16[32,128], index: 1, kind: input, shape index: {}]
  %s2 = inlined_call_operand.vmem [shape: f32[1,128], index: 2, kind: input, shape index: {}]
  %s3 = inlined_call_operand.hbm [shape: f32[8,128], index: 3, kind: output, shape index: {}]
  %s4 = sld [smem:[#allocation0]]
  $region30: #{tpu_custom_call.1} parent=0
    _
  %s6 = ssub.s32 1, %s4
  %s7 = scalar_select 0, %s6, %s4
  $region1: #{tpu_custom_call.1} parent=0
    #allocation2 [shape = 'u8[4096]{0}', space=vmem, size = 0x1000, scoped, tag = 'input window, operand 0, single buffered']
    #allocation3 [shape = 's32[1]{0}', space=sflag, size = 0x4, scoped, tag = 'scoped memory for tpu_custom_call.1']
    #allocation4 [shape = 's32[1]{0}', space=sflag, size = 0x4, scoped, tag = 'scoped memory for tpu_custom_call.1']
    #allocation5 [shape = 'u8[8192]{0}', space=vmem, size = 0x2000, scoped, tag = 'input window, operand 1, single buffered']
    #allocation6 [shape = 's32[1]{0}', space=sflag, size = 0x4, scoped, tag = 'scoped memory for tpu_custom_call.1']
    #allocation7 [shape = 'u8[4096]{0}', space=vmem, size = 0x1000, scoped, tag = 'output window, operand 0, single buffered']
    %8 = vsyncpa [#allocation3], 0
    %9 = vsyncpa [#allocation6], 0
    %10 = vsyncpa [#allocation4], 0
    // Predicated region
    $region2: #{tpu_custom_call.1} parent=1 // pred_check
      _
    $region3: #{tpu_custom_call.1} parent=1 // pred_check_branch
      %12 = sbr.rel (0) target = $region5
    $region4: #{tpu_custom_call.1} parent=1 // pred_region
      %s14 = ssub.s32 128, 128
      %15 = vsyncadd [#allocation3], %s14
      %s17 = sshll.u32 [#allocation2], 4
      %s18 = int_to_ptr.vmem [resolvable:$true] %s17
      %20 = dma.hbm_to_vmem [thread:$0]  %s0, 128, %s18, [#allocation3]
    $region5: #{tpu_custom_call.1} parent=1 // pred_fallthru
      _
    // Predicated region
    $region6: #{tpu_custom_call.1} parent=1 // pred_check
      _
    $region7: #{tpu_custom_call.1} parent=1 // pred_check_branch
      %22 = sbr.rel (0) target = $region9
    $region8: #{tpu_custom_call.1} parent=1 // pred_region
      %s24 = ssub.s32 256, 256
      %25 = vsyncadd [#allocation6], %s24
      %s26 = sshll.u32 [#allocation5], 4
      %s27 = int_to_ptr.vmem [resolvable:$true] %s26
      %32 = dma.hbm_to_vmem [thread:$0]  %s1, 256, %s27, [#allocation6], 64, 64, 4
    $region9: #{tpu_custom_call.1} parent=1 // pred_fallthru
      _
    // Predicated region
    $region10: #{tpu_custom_call.1} parent=1 // pred_check
      _
    $region11: #{tpu_custom_call.1} parent=1 // pred_check_branch
      %34 = sbr.rel (0) target = $region13
    $region12: #{tpu_custom_call.1} parent=1 // pred_region
      _
    $region13: #{tpu_custom_call.1} parent=1 // pred_fallthru
      _
    // Predicated region
    $region14: #{tpu_custom_call.1} parent=1 // pred_check
      _
    $region15: #{tpu_custom_call.1} parent=1 // pred_check_branch
      %36 = sbr.rel (0) target = $region17
    $region16: #{tpu_custom_call.1} parent=1 // pred_region
      %37 = dma.done [#allocation3], 128
    $region17: #{tpu_custom_call.1} parent=1 // pred_fallthru
      _
    // Predicated region
    $region18: #{tpu_custom_call.1} parent=1 // pred_check
      _
    $region19: #{tpu_custom_call.1} parent=1 // pred_check_branch
      %39 = sbr.rel (0) target = $region21
    $region20: #{tpu_custom_call.1} parent=1 // pred_region
      %40 = dma.done [#allocation6], 256
    $region21: #{tpu_custom_call.1} parent=1 // pred_fallthru
      _
    %v42 = vld [vmem:[#allocation2] sm:$0xff]
    %v43 = vpack.c.bf16 %v42, %v42
    %v44 = vld [vmem:[#allocation5] sm:$0xf]
    %v45 = vld [vmem:[#allocation5 + $0x4] sm:$0xf]
    %v46 = vld [vmem:[#allocation5 + $0x8] sm:$0xf]
    %v47 = vld [vmem:[#allocation5 + $0xc] sm:$0xf]
    %v48 = vld [vmem:[%s2] sm:$0x1]
    %v50 = vlaneseq
    %v51 = vshrl.u32 %v50, 7
    %v52 = vsub.s32 0, %v51
    %v53 = vrot.slane %v48, %v52
    %v59 = vunpack.c.l.b16 %v44
    %v60 = vunpack.c.l.b16 %v45
    %v61 = vunpack.c.l.b16 %v46
    %v62 = vunpack.c.l.b16 %v47
    %v63 = vpack.c.b16 %v60, %v59
    %v64 = vpack.c.b16 %v62, %v61
    %vm67 = vcmask 261120
    %v69 = vsel %vm67, %v43, 0
    %71 = vmatprep.subr.bf16.mxu0 0
    %72 = vmatpush1.bf16.msra.mxu0 0
    %73 = vmatprep.subr.bf16.mxu0 0
    %74 = vmatpush1.bf16.msra.mxu0 0
    %75 = vmatprep.subr.bf16.mxu0 0
    %76 = vmatpush1.bf16.msra.mxu0 0
    %77 = vmatprep.subr.bf16.mxu0 0
    %78 = vmatpush1.bf16.msra.mxu0 0
    %79 = vmatprep.subr.bf16.mxu0 0
    %80 = vmatpush1.bf16.msra.mxu0 0
    %81 = vmatprep.subr.bf16.mxu0 0
    %82 = vmatpush1.bf16.msra.mxu0 0
    %83 = vmatprep.subr.bf16.mxu0 0
    %84 = vmatpush1.bf16.msra.mxu0 %v64
    %85 = vmatprep.subr.bf16.mxu0 0
    %86 = vmatpush1.bf16.msra.mxu0 %v63
    %87 = vmatprep.subr.bf16.mxu0 0
    %88 = vmatpush2.bf16.msra.mxu0 0
    %89 = vmatprep.subr.bf16.mxu0 0
    %90 = vmatpush2.bf16.msra.mxu0 0
    %91 = vmatprep.subr.bf16.mxu0 0
    %92 = vmatpush2.bf16.msra.mxu0 0
    %93 = vmatprep.subr.bf16.mxu0 0
    %94 = vmatpush2.bf16.msra.mxu0 0
    %95 = vmatprep.subr.bf16.mxu0 0
    %96 = vmatpush2.bf16.msra.mxu0 0
    %97 = vmatprep.subr.bf16.mxu0 0
    %98 = vmatpush2.bf16.msra.mxu0 0
    %99 = vmatprep.subr.bf16.mxu0 0
    %100 = vmatpush2.bf16.msra.mxu0 0
    %101 = vmatprep.subr.bf16.mxu0 0
    %102 = vmatpush2.bf16.msra.mxu0 0
    %103 = vmatprep.mubr.bf16.mxu0 0
    %104 = vmatmul.mubr.bf16.gmra.mxu0 %v69
    %v105 = vpop.f32.mrf.mxu0
    %v106 = vadd.f32 %v53, %v105
    %v107 = vpop.f32.mrf.mxu0
    %v108 = vpop.f32.mrf.mxu0
    %v109 = vpop.f32.mrf.mxu0
    %110 = vdwg.mxu0
    %111 = vmax.xlane.f32.xlu0 %v106
    %v112 = vpop.xlane.xlu0 %111
    %v113 = vsub.f32 %v106, %v112
    %v114 = vmul.f32 %v113, 1.442695
    %v115 = vpow.pop %v114
    %116 = vadd.xlane.f32.xlu0 %v115
    %v117 = vpop.xlane.xlu0 %116
    %v118 = vrcp.pop %v117
    %v119 = vmul.f32 %v115, %v118
    %120 = vst [vmem:[#allocation7] sm:$0xff] %v119
    // Predicated region
    $region22: #{tpu_custom_call.1} parent=1 // pred_check
      _
    $region23: #{tpu_custom_call.1} parent=1 // pred_check_branch
      %122 = sbr.rel (0) target = $region25
    $region24: #{tpu_custom_call.1} parent=1 // pred_region
      %s124 = ssub.s32 128, 128
      %125 = vsyncadd [#allocation4], %s124
      %s127 = sshll.u32 [#allocation7], 4
      %s128 = int_to_ptr.vmem [resolvable:$true] %s127
      %130 = dma.vmem_to_hbm [thread:$0]  %s128, 128, %s3, [#allocation4]
    $region25: #{tpu_custom_call.1} parent=1 // pred_fallthru
      _
    // Predicated region
    $region26: #{tpu_custom_call.1} parent=1 // pred_check
      _
    $region27: #{tpu_custom_call.1} parent=1 // pred_check_branch
      %132 = sbr.rel (0) target = $region29
    $region28: #{tpu_custom_call.1} parent=1 // pred_region
      %133 = dma.done [#allocation4], 128
    $region29: #{tpu_custom_call.1} parent=1 // pred_fallthru
      _
    %134 = vsyncpa [#allocation3], 1
    %135 = vsyncpa [#allocation6], 1
    %136 = vsyncpa [#allocation4], 1

</llo_original>
